<compile_context>
chip_gen: v7x
topology: tpu7x:2x2x1
jax: 0.10.0
libtpu: 0.0.40
codegen_flags: <defaults>
</compile_context>

<pallas_src>
import functools

import jax
import jax.numpy as jnp
from jax.experimental import pallas as pl
from jax.experimental.pallas import tpu as pltpu


# ----------------------------- Pallas kernel --------------------------------
def _pool_scorer_kernel(enc_ref, slab_ref, wpool_ref, wrest_ref, out_ref, acc_ref,
                        *, inv_seq_len):
    # enc_ref:  [B, s_tile, H]  bf16   (one S tile per grid step, reduction axis)
    # slab_ref: [B, K_rest]     f32    (readability | features | 1.0 | zero-pad)
    # wpool_ref:[H, T_pad]      f32    (scorer rows 0:H, cols padded to 128)
    # wrest_ref:[K_rest, T_pad] f32    (scorer rows H:119 | bias row | zero rows)
    # out_ref:  [B, T_pad]      f32    (lane-dense; sliced to num_traits outside)
    # acc_ref:  [B, H]          f32    (running seq-sum of enc_out)
    k = pl.program_id(1)

    @pl.when(k == 0)
    def _():
        acc_ref[...] = jnp.zeros_like(acc_ref)

    # Fold the seq-mean into a running f32 sum over S tiles.  The per-tile
    # sublane reduce is tiny and pipelined; the full activation never sits in VMEM.
    acc_ref[...] += jnp.sum(enc_ref[...].astype(jnp.float32), axis=1)

    @pl.when(k == pl.num_programs(1) - 1)
    def _():
        pool = acc_ref[...] * inv_seq_len                       # [B, H] mean over seq
        # Two MXU dots on 8-aligned, pre-split weights (no unaligned W slices,
        # no lane-concat).  Bias is the constant-1 column of slab times its W row.
        logits = (
            jnp.dot(pool, wpool_ref[...], preferred_element_type=jnp.float32)
            + jnp.dot(slab_ref[...], wrest_ref[...],
                      preferred_element_type=jnp.float32)
        )
        out_ref[...] = jax.nn.sigmoid(logits)


def pool_and_score(enc_out, static_slab, w_pool, w_rest, *, seq_tile=None):
    """Fused mean-pool (over seq) + concat + linear scorer + sigmoid."""
    B, S, H = enc_out.shape
    K_rest = static_slab.shape[-1]
    T_pad = w_pool.shape[-1]

    if seq_tile is None or S % seq_tile != 0:
        seq_tile = S
        for cand in (256, 128, 64, 32, 16, 8):
            if S % cand == 0:
                seq_tile = cand
                break
    n_s = S // seq_tile

    kernel = functools.partial(_pool_scorer_kernel, inv_seq_len=1.0 / S)

    flops = int(B * S * H + 2 * B * (H + K_rest) * T_pad)
    bytes_accessed = int(
        enc_out.size * enc_out.dtype.itemsize
        + static_slab.size * 4 + w_pool.size * 4 + w_rest.size * 4
        + B * T_pad * 4)

    out = pl.pallas_call(
        kernel,
        out_shape=jax.ShapeDtypeStruct((B, T_pad), jnp.float32),
        grid_spec=pltpu.PrefetchScalarGridSpec(
            num_scalar_prefetch=0,
            # (batch blocks [parallel -> v7x dual TC], seq reduction blocks [arbitrary]).
            # At demo sizes the whole batch is one block; for large B tile it in
            # multiples of 8 rows to actually shard across cores.
            grid=(1, n_s),
            in_specs=[
                pl.BlockSpec((B, seq_tile, H), lambda b, k: (b, k, 0)),
                pl.BlockSpec((B, K_rest), lambda b, k: (b, 0)),
                pl.BlockSpec((H, T_pad), lambda b, k: (0, 0)),
                pl.BlockSpec((K_rest, T_pad), lambda b, k: (0, 0)),
            ],
            out_specs=pl.BlockSpec((B, T_pad), lambda b, k: (b, 0)),
            scratch_shapes=[pltpu.VMEM((B, H), jnp.float32)],
        ),
        compiler_params=pltpu.CompilerParams(
            dimension_semantics=("parallel", "arbitrary"),
            vmem_limit_bytes=64 * 1024 * 1024),
        cost_estimate=pl.CostEstimate(
            flops=flops, transcendentals=B * T_pad, bytes_accessed=bytes_accessed),
    )(enc_out, static_slab, w_pool, w_rest)
    return out


# ------------------------- synthetic "BaseModel" -----------------------------
class BaseModelPallas:
    """JAX/Pallas re-implementation of BaseModel.forward (encoder is synthetic)."""

    K_PAD = 128   # padded concat dim (H + 35 + 52 + bias-col + zeros)
    T_PAD = 128   # padded (lane-dense) output dim

    def __init__(self, key, vocab=128, hidden=32, n_read=35, n_feat=52,
                 num_of_trait=9, seq_tile=16):
        assert hidden % 8 == 0, "hidden must be 8-aligned for the W split"
        assert hidden + n_read + n_feat + 1 <= self.K_PAD
        k_emb, k_enc, k_w = jax.random.split(key, 3)
        self.hidden = hidden
        self.n_read = n_read
        self.n_feat = n_feat
        self.num_of_trait = num_of_trait
        self.seq_tile = seq_tile
        self.k_rest = self.K_PAD - hidden

        # synthetic deterministic "encoder" params (stand-in for AutoModel)
        self.embedding = jax.random.normal(k_emb, (vocab, hidden), jnp.float32) * 0.02
        self.enc_proj = jax.random.normal(k_enc, (hidden, hidden), jnp.float32) * 0.05

        # BaseScorer params: Linear(hidden + 35 + 52, num_of_trait)
        in_dim = hidden + n_read + n_feat
        self.scorer_w = jax.random.normal(k_w, (in_dim, num_of_trait), jnp.float32) * 0.1
        self.scorer_b = jnp.zeros((num_of_trait,), jnp.float32)

        # Pre-split / padded weights for the kernel (built once at init).
        col_pad = self.T_PAD - num_of_trait
        rest_rows = n_read + n_feat + 1                       # readability|features|bias
        w_rest_core = jnp.concatenate(
            [self.scorer_w[hidden:],                          # [87, T]
             self.scorer_b.reshape(1, -1),                    # bias row (slab col == 1.0)
             jnp.zeros((self.k_rest - rest_rows, num_of_trait), jnp.float32)],
            axis=0)                                           # [K_rest, T]
        self.w_pool_pad = jnp.pad(self.scorer_w[:hidden], ((0, 0), (0, col_pad)))
        self.w_rest_pad = jnp.pad(w_rest_core, ((0, 0), (0, col_pad)))

    def encode(self, essay_input):
        # plain-JAX glue standing in for encoder(**essay_input).last_hidden_state;
        # emitted in bf16 to halve the HBM traffic of the only large kernel operand.
        ids = essay_input["input_ids"]                        # [B, S]
        emb = jnp.take(self.embedding, ids, axis=0)           # [B, S, H]
        return jnp.tanh(emb @ self.enc_proj).astype(jnp.bfloat16)

    def _static_slab(self, readability, features):
        # [B, K_rest] = readability | features | 1.0 (bias column) | zero pad
        B = readability.shape[0]
        tail = self.k_rest - (self.n_read + self.n_feat + 1)
        return jnp.concatenate(
            [readability.astype(jnp.float32), features.astype(jnp.float32),
             jnp.ones((B, 1), jnp.float32), jnp.zeros((B, tail), jnp.float32)],
            axis=-1)

    def __call__(self, prompt_input, essay_input, essay_readability,
                 essay_features, norm_scores):
        enc_out = self.encode(essay_input)                    # last_hidden_state [B,S,H] bf16
        slab = self._static_slab(essay_readability, essay_features)
        scores_pad = pool_and_score(enc_out, slab, self.w_pool_pad, self.w_rest_pad,
                                    seq_tile=self.seq_tile)   # [B, T_PAD]
        return scores_pad[:, : self.num_of_trait]             # [B, num_traits]


# --------------------------------- demo --------------------------------------
if __name__ == "__main__":
    key = jax.random.PRNGKey(0)
    k_model, k_ids, k_read, k_feat, k_norm = jax.random.split(key, 5)

    B, S, H = 2, 64, 32
    model = BaseModelPallas(k_model, vocab=128, hidden=H, seq_tile=16)

    essay_input = {
        "input_ids": jax.random.randint(k_ids, (B, S), 0, 128),
        "attention_mask": jnp.ones((B, S), jnp.int32),
    }
    prompt_input = None  # unused by the reference forward
    essay_readability = jax.random.normal(k_read, (B, 35), jnp.float32)
    essay_features = jax.random.normal(k_feat, (B, 52), jnp.float32)
    norm_scores = jax.random.uniform(k_norm, (B, 9), jnp.float32)

    out = model(prompt_input, essay_input, essay_readability,
                essay_features, norm_scores)
    out = jax.block_until_ready(out)

    # pure-JAX reference of the fused hot path, for sanity
    enc_out = model.encode(essay_input)                       # same bf16 activations
    pool = jnp.mean(enc_out.astype(jnp.float32), axis=1)
    feats = jnp.concatenate([pool, essay_readability, essay_features], axis=-1)
    ref = jax.nn.sigmoid(feats @ model.scorer_w + model.scorer_b)

    assert out.shape == (B, 9)
    assert jnp.allclose(out, ref, atol=1e-5), "Pallas output mismatch vs reference"

    print("KERNEL_OK")
</pallas_src>

<mosaic_0001>
module attributes {stable_mosaic.version = 11 : i64} {
  func.func @_pool_scorer_kernel(%arg0: i32, %arg1: i32, %arg2: memref<2x16x32xbf16, #tpu.memory_space<vmem>>, %arg3: memref<2x96xf32, #tpu.memory_space<vmem>>, %arg4: memref<32x128xf32, #tpu.memory_space<vmem>>, %arg5: memref<96x128xf32, #tpu.memory_space<vmem>>, %arg6: memref<2x128xf32, #tpu.memory_space<vmem>>, %arg7: memref<2x32xf32, #tpu.memory_space<vmem>>) attributes {dimension_semantics = [#tpu.dimension_semantics<parallel>, #tpu.dimension_semantics<arbitrary>], iteration_bounds = array<i64: 1, 4>, scalar_prefetch = 0 : i64, scratch_operands = 1 : i64, tpu.core_type = #tpu.core_type<tc>, window_params = [{transform_indices = @transform_0, window_bounds = array<i64: 2, 16, 32>}, {transform_indices = @transform_1, window_bounds = array<i64: 2, 96>}, {pipeline_mode = #tpu.pipeline_mode<synchronous>, transform_indices = @transform_2, window_bounds = array<i64: 32, 128>}, {pipeline_mode = #tpu.pipeline_mode<synchronous>, transform_indices = @transform_3, window_bounds = array<i64: 96, 128>}, {transform_indices = @transform_4, window_bounds = array<i64: 2, 128>}]} {
    %c0_i32 = arith.constant 0 : i32
    %0 = arith.cmpi eq, %arg1, %c0_i32 : i32
    %1 = arith.extui %0 : i1 to i32
    %c0_i32_0 = arith.constant 0 : i32
    %2 = arith.cmpi ne, %1, %c0_i32_0 : i32
    scf.if %2 {
      %cst_8 = arith.constant 0.000000e+00 : f32
      %12 = vector.broadcast %cst_8 : f32 to vector<2x32xf32>
      %c0_9 = arith.constant 0 : index
      %c0_10 = arith.constant 0 : index
      %13 = vector.load %arg7[%c0_9, %c0_10] : memref<2x32xf32, #tpu.memory_space<vmem>>, vector<2x32xf32>
      tpu.vector_store %arg7[%c0_9, %c0_10], %12 {strides = array<i32>} : memref<2x32xf32, #tpu.memory_space<vmem>>, vector<2x32xf32>,
    } else {
    }
    %c0 = arith.constant 0 : index
    %c0_1 = arith.constant 0 : index
    %3 = vector.load %arg7[%c0, %c0_1] : memref<2x32xf32, #tpu.memory_space<vmem>>, vector<2x32xf32>
    %c0_2 = arith.constant 0 : index
    %c0_3 = arith.constant 0 : index
    %c0_4 = arith.constant 0 : index
    %4 = vector.load %arg2[%c0_2, %c0_3, %c0_4] : memref<2x16x32xbf16, #tpu.memory_space<vmem>>, vector<2x16x32xbf16>
    %5 = arith.extf %4 : vector<2x16x32xbf16> to vector<2x16x32xf32>
    %cst = arith.constant dense<0.000000e+00> : vector<2x32xf32>
    %6 = vector.multi_reduction <add>, %5, %cst [1] : vector<2x16x32xf32> to vector<2x32xf32>
    %7 = arith.addf %3, %6 : vector<2x32xf32>
    %c0_5 = arith.constant 0 : index
    %c0_6 = arith.constant 0 : index
    %8 = vector.load %arg7[%c0_5, %c0_6] : memref<2x32xf32, #tpu.memory_space<vmem>>, vector<2x32xf32>
    tpu.vector_store %arg7[%c0_5, %c0_6], %7 {strides = array<i32>} : memref<2x32xf32, #tpu.memory_space<vmem>>, vector<2x32xf32>,
    %c3_i32 = arith.constant 3 : i32
    %9 = arith.cmpi eq, %arg1, %c3_i32 : i32
    %10 = arith.extui %9 : i1 to i32
    %c0_i32_7 = arith.constant 0 : i32
    %11 = arith.cmpi ne, %10, %c0_i32_7 : i32
    scf.if %11 {
      %c0_8 = arith.constant 0 : index
      %c0_9 = arith.constant 0 : index
      %12 = vector.load %arg7[%c0_8, %c0_9] : memref<2x32xf32, #tpu.memory_space<vmem>>, vector<2x32xf32>
      %cst_10 = arith.constant 1.562500e-02 : f32
      %13 = vector.broadcast %cst_10 : f32 to vector<2x32xf32>
      %14 = arith.mulf %12, %13 : vector<2x32xf32>
      %c0_11 = arith.constant 0 : index
      %c0_12 = arith.constant 0 : index
      %15 = vector.load %arg4[%c0_11, %c0_12] : memref<32x128xf32, #tpu.memory_space<vmem>>, vector<32x128xf32>
      %cst_13 = arith.constant dense<0.000000e+00> : vector<2x128xf32>
      %16 = tpu.matmul %14, %15, %cst_13 {dimension_numbers = #tpu.dot_dimension_numbers<[1], [0], [0], [1], [0, 0, 1, 1], [], []>} : vector<2x32xf32>, vector<32x128xf32>, vector<2x128xf32> -> vector<2x128xf32>
      %c0_14 = arith.constant 0 : index
      %c0_15 = arith.constant 0 : index
      %17 = vector.load %arg3[%c0_14, %c0_15] : memref<2x96xf32, #tpu.memory_space<vmem>>, vector<2x96xf32>
      %c0_16 = arith.constant 0 : index
      %c0_17 = arith.constant 0 : index
      %18 = vector.load %arg5[%c0_16, %c0_17] : memref<96x128xf32, #tpu.memory_space<vmem>>, vector<96x128xf32>
      %cst_18 = arith.constant dense<0.000000e+00> : vector<2x128xf32>
      %19 = tpu.matmul %17, %18, %cst_18 {dimension_numbers = #tpu.dot_dimension_numbers<[1], [0], [0], [1], [0, 0, 1, 1], [], []>} : vector<2x96xf32>, vector<96x128xf32>, vector<2x128xf32> -> vector<2x128xf32>
      %20 = arith.addf %16, %19 : vector<2x128xf32>
      %21 = arith.negf %20 : vector<2x128xf32>
      %22 = math.exp %21 : vector<2x128xf32>
      %cst_19 = arith.constant 1.000000e+00 : f32
      %23 = vector.broadcast %cst_19 : f32 to vector<2x128xf32>
      %24 = arith.addf %23, %22 : vector<2x128xf32>
      %25 = arith.divf %23, %24 : vector<2x128xf32>
      %c0_20 = arith.constant 0 : index
      %c0_21 = arith.constant 0 : index
      %26 = vector.load %arg6[%c0_20, %c0_21] : memref<2x128xf32, #tpu.memory_space<vmem>>, vector<2x128xf32>
      tpu.vector_store %arg6[%c0_20, %c0_21], %25 {strides = array<i32>} : memref<2x128xf32, #tpu.memory_space<vmem>>, vector<2x128xf32>,
    } else {
    }
    return
  }
  func.func @transform_0(%arg0: i32, %arg1: i32) -> (i32, i32, i32) {
    %c0_i32 = arith.constant 0 : i32
    %c0_i32_0 = arith.constant 0 : i32
    return %arg0, %arg1, %c0_i32 : i32, i32, i32
  }
  func.func @transform_1(%arg0: i32, %arg1: i32) -> (i32, i32) {
    %c0_i32 = arith.constant 0 : i32
    %c0_i32_0 = arith.constant 0 : i32
    return %arg0, %c0_i32 : i32, i32
  }
  func.func @transform_2(%arg0: i32, %arg1: i32) -> (i32, i32) {
    %c0_i32 = arith.constant 0 : i32
    %c0_i32_0 = arith.constant 0 : i32
    %c0_i32_1 = arith.constant 0 : i32
    return %c0_i32, %c0_i32_0 : i32, i32
  }
  func.func @transform_3(%arg0: i32, %arg1: i32) -> (i32, i32) {
    %c0_i32 = arith.constant 0 : i32
    %c0_i32_0 = arith.constant 0 : i32
    %c0_i32_1 = arith.constant 0 : i32
    return %c0_i32, %c0_i32_0 : i32, i32
  }
  func.func @transform_4(%arg0: i32, %arg1: i32) -> (i32, i32) {
    %c0_i32 = arith.constant 0 : i32
    %c0_i32_0 = arith.constant 0 : i32
    return %arg0, %c0_i32 : i32, i32
  }
}

</mosaic_0001>

<llo_original>
// kernel: tpu_custom_call.1
$region0: #{tpu_custom_call.1}
  #allocation0 [shape = 'u32[]', space=smem, size = 0x4, offset = 0x4, fixed_abs, tag = 'smem constant byte address 0x4 - core index']
  #allocation1 [shape = 'u32[144,128]{1,0:T(1,128)}', space=vmem, size = 0x12000, scoped, tag = 'internal scratch']
  #allocation2 [shape = 'f32[2,32]{1,0:T(2,128)}', space=vmem, size = 0x400, scoped, tag = 'scratch operand']
  #allocation12 [shape = 's32[]', space=sflag, size = 0x4, offset = 0, fixed_abs, tag = 'sflag constant byte address 0x0 - dummy sync flag']
  %s0 = inlined_call_operand.hbm [shape: bf16[2,64,32], index: 0, kind: input, shape index: {}]
  %s1 = inlined_call_operand.hbm [shape: f32[2,96], index: 1, kind: input, shape index: {}]
  %s2 = inlined_call_operand.hbm [shape: f32[32,128], index: 2, kind: input, shape index: {}]
  %s3 = inlined_call_operand.hbm [shape: f32[96,128], index: 3, kind: input, shape index: {}]
  %s4 = inlined_call_operand.hbm [shape: f32[2,128], index: 4, kind: output, shape index: {}]
  %s5 = sld [smem:[#allocation0]]
  $region73: #{tpu_custom_call.1} parent=0
    _
  %s7 = ssub.s32 1, %s5
  %s8 = scalar_select 0, %s7, %s5
  $region1: #{tpu_custom_call.1} parent=0
    #allocation3 [shape = 'u8[16384]{0}', space=vmem, size = 0x4000, scoped, tag = 'input window, operand 0']
    #allocation4 [shape = 's32[2]{0}', space=sflag, size = 0x8, scoped, tag = 'scoped memory for tpu_custom_call.1']
    #allocation5 [shape = 's32[2]{0}', space=sflag, size = 0x8, scoped, tag = 'scoped memory for tpu_custom_call.1']
    #allocation6 [shape = 'u8[1024]{0}', space=vmem, size = 0x400, scoped, tag = 'input window, operand 1, single buffered']
    #allocation7 [shape = 's32[1]{0}', space=sflag, size = 0x4, scoped, tag = 'scoped memory for tpu_custom_call.1']
    #allocation8 [shape = 'u8[16384]{0}', space=vmem, size = 0x4000, scoped, tag = 'input window, operand 2, single buffered']
    #allocation9 [shape = 'u8[49152]{0}', space=vmem, size = 0xc000, scoped, tag = 'input window, operand 3, single buffered']
    #allocation10 [shape = 's32[1]{0}', space=sflag, size = 0x4, scoped, tag = 'scoped memory for tpu_custom_call.1']
    #allocation11 [shape = 'u8[1024]{0}', space=vmem, size = 0x400, scoped, tag = 'output window, operand 0, single buffered']
    %9 = vsyncpa [#allocation4], 0
    %s10 = scalar_lea.sflag [#allocation4], 1
    %11 = vsyncpa %s10, 0
    %12 = vsyncpa [#allocation7], 0
    %13 = vsyncpa [#allocation10], 0
    %14 = vsyncpa [#allocation5], 0
    loop: start=0, step=1, limit=6
    $region2: #{tpu_custom_call.1} parent=1 // loop_pre_header
      _
    $region3: #{tpu_custom_call.1} parent=1 // loop_header
      %s16 = sphi 0, %s20
      %p17 = scmp.ge.s32.totalorder %s16, 6
      %s23 = sphi 0, %s35
      %s24 = sphi 0, %s31
      %s25 = sphi 0, %s23
      %s26 = sphi 0, %s24
      %s27 = sphi 0, %s25
      %s28 = sphi 0, %s26
      %s40 = sphi 0, %s42
      %s43 = sphi 0, %s40
      %s44 = sphi 0, %s43
      %s60 = sphi 0, %s44
      %s66 = sphi 0, %s68
      %s69 = sphi 0, %s66
      %s70 = sphi 0, %s69
      %s86 = sphi 0, %s70
      %s90 = sphi 0, %s90
      %s92 = sphi 0, %s90
      %s93 = sphi 0, %s92
      %s107 = sphi 0, %s93
      %s111 = sphi 0, %s111
      %s113 = sphi 0, %s111
      %s114 = sphi 0, %s113
      %s128 = sphi 0, %s114
      %s134 = sphi 0, %s136
      %s137 = sphi 0, %s134
      %s138 = sphi 0, %s137
      %s154 = sphi 0, %s138
    $region4: #{tpu_custom_call.1} parent=1 // loop_header_branch
      %19 = sbr.rel (%p17) target = $region8
    $region5: #{tpu_custom_call.1} parent=1 // loop_body
      %s21 = ssub.s32 %s16, 1
      %s22 = ssub.s32 %s16, 2
      %s29 = sadd.s32 1, %s24
      %p30 = scmp.ge.s32.totalorder %s29, 4
      %s31 = scalar_select %p30, 0, %s29
      %s32 = sadd.s32 1, %s23
      %s33 = scalar_select %p30, %s32, %s23
      %p34 = scmp.ge.s32.totalorder %s33, 1
      %s35 = scalar_select %p34, 0, %s33
      %s36 = ssub.s32 %s23, %s35
      %s37 = ssub.s32 %s24, %s31
      %s38 = sor.u32 %s36, %s37
      %p39 = scmp.eq.s32.totalorder %s38, 0
      %s41 = sadd.s32 %s40, 1
      %s42 = scalar_select %p39, %s40, %s41
      %p45 = pneg %p39
      %p46 = scmp.eq.s32.totalorder %s16, 3
      %p47 = por %p45, %p46
      %p48 = scmp.ne.s32.totalorder %s40, %s43
      %p49 = scmp.eq.s32.totalorder %s16, 0
      %p50 = por %p48, %p49
      %p51 = scmp.ne.s32.totalorder %s40, %s43
      %p52 = scmp.eq.s32.totalorder %s21, 3
      %p53 = por %p51, %p52
      %p54 = scmp.ne.s32.totalorder %s43, %s44
      %p55 = scmp.eq.s32.totalorder %s21, 0
      %p56 = por %p54, %p55
      %p57 = scmp.ne.s32.totalorder %s43, %s44
      %p58 = scmp.eq.s32.totalorder %s22, 3
      %p59 = por %p57, %p58
      %p61 = scmp.ne.s32.totalorder %s44, %s60
      %p62 = scmp.eq.s32.totalorder %s22, 0
      %p63 = por %p61, %p62
      %s64 = ssub.s32 %s23, %s35
      %p65 = scmp.eq.s32.totalorder %s64, 0
      %s67 = sadd.s32 %s66, 1
      %s68 = scalar_select %p65, %s66, %s67
      %p71 = pneg %p65
      %p72 = scmp.eq.s32.totalorder %s16, 3
      %p73 = por %p71, %p72
      %p74 = scmp.ne.s32.totalorder %s66, %s69
      %p75 = scmp.eq.s32.totalorder %s16, 0
      %p76 = por %p74, %p75
      %p77 = scmp.ne.s32.totalorder %s66, %s69
      %p78 = scmp.eq.s32.totalorder %s21, 3
      %p79 = por %p77, %p78
      %p80 = scmp.ne.s32.totalorder %s69, %s70
      %p81 = scmp.eq.s32.totalorder %s21, 0
      %p82 = por %p80, %p81
      %p83 = scmp.ne.s32.totalorder %s69, %s70
      %p84 = scmp.eq.s32.totalorder %s22, 3
      %p85 = por %p83, %p84
      %p87 = scmp.ne.s32.totalorder %s70, %s86
      %p88 = scmp.eq.s32.totalorder %s22, 0
      %p89 = por %p87, %p88
      %s91 = sadd.s32 %s90, 1
      %p94 = scmp.eq.s32.totalorder %s16, 3
      %p95 = scmp.ne.s32.totalorder %s90, %s92
      %p96 = scmp.eq.s32.totalorder %s16, 0
      %p97 = por %p95, %p96
      %p98 = scmp.ne.s32.totalorder %s90, %s92
      %p99 = scmp.eq.s32.totalorder %s21, 3
      %p100 = por %p98, %p99
      %p101 = scmp.ne.s32.totalorder %s92, %s93
      %p102 = scmp.eq.s32.totalorder %s21, 0
      %p103 = por %p101, %p102
      %p104 = scmp.ne.s32.totalorder %s92, %s93
      %p105 = scmp.eq.s32.totalorder %s22, 3
      %p106 = por %p104, %p105
      %p108 = scmp.ne.s32.totalorder %s93, %s107
      %p109 = scmp.eq.s32.totalorder %s22, 0
      %p110 = por %p108, %p109
      %s112 = sadd.s32 %s111, 1
      %p115 = scmp.eq.s32.totalorder %s16, 3
      %p116 = scmp.ne.s32.totalorder %s111, %s113
      %p117 = scmp.eq.s32.totalorder %s16, 0
      %p118 = por %p116, %p117
      %p119 = scmp.ne.s32.totalorder %s111, %s113
      %p120 = scmp.eq.s32.totalorder %s21, 3
      %p121 = por %p119, %p120
      %p122 = scmp.ne.s32.totalorder %s113, %s114
      %p123 = scmp.eq.s32.totalorder %s21, 0
      %p124 = por %p122, %p123
      %p125 = scmp.ne.s32.totalorder %s113, %s114
      %p126 = scmp.eq.s32.totalorder %s22, 3
      %p127 = por %p125, %p126
      %p129 = scmp.ne.s32.totalorder %s114, %s128
      %p130 = scmp.eq.s32.totalorder %s22, 0
      %p131 = por %p129, %p130
      %s132 = ssub.s32 %s23, %s35
      %p133 = scmp.eq.s32.totalorder %s132, 0
      %s135 = sadd.s32 %s134, 1
      %s136 = scalar_select %p133, %s134, %s135
      %p139 = pneg %p133
      %p140 = scmp.eq.s32.totalorder %s16, 3
      %p141 = por %p139, %p140
      %p142 = scmp.ne.s32.totalorder %s134, %s137
      %p143 = scmp.eq.s32.totalorder %s16, 0
      %p144 = por %p142, %p143
      %p145 = scmp.ne.s32.totalorder %s134, %s137
      %p146 = scmp.eq.s32.totalorder %s21, 3
      %p147 = por %p145, %p146
      %p148 = scmp.ne.s32.totalorder %s137, %s138
      %p149 = scmp.eq.s32.totalorder %s21, 0
      %p150 = por %p148, %p149
      %p151 = scmp.ne.s32.totalorder %s137, %s138
      %p152 = scmp.eq.s32.totalorder %s22, 3
      %p153 = por %p151, %p152
      %p155 = scmp.ne.s32.totalorder %s138, %s154
      %p156 = scmp.eq.s32.totalorder %s22, 0
      %p157 = por %p155, %p156
      %p158 = scmp.le.s32.totalorder 1, %s16
      %p159 = scmp.lt.s32.totalorder %s16, 5
      %p160 = pnand %p158, %p159
      %p161 = pneg %p160
      // Predicated region
      $region9: #{tpu_custom_call.1} parent=5 // pred_check
        _
      $region10: #{tpu_custom_call.1} parent=5 // pred_check_branch
        %163 = sbr.rel (%p160) target = $region12
      $region11: #{tpu_custom_call.1} parent=5 // pred_region
        %s164 = ssub.s32 %s16, 1
        // Predicated region
        $region13: #{tpu_custom_call.1} parent=11 // pred_check
          %p165 = pneg %p82
        $region14: #{tpu_custom_call.1} parent=11 // pred_check_branch
          %167 = sbr.rel (%p165) target = $region16
        $region15: #{tpu_custom_call.1} parent=11 // pred_region
          %s169 = ssub.s32 32, 32
          %170 = vsyncadd [#allocation7], %s169
          %s171 = smul.addr %s25, 32
          %s172 = scalar_lea.hbm %s1, %s171
          %s174 = sshll.u32 [#allocation6], 4
          %s175 = int_to_ptr.vmem [resolvable:$true] %s174
          %177 = dma.hbm_to_vmem [thread:$0]  %s172, 32, %s175, [#allocation7]
        $region16: #{tpu_custom_call.1} parent=11 // pred_fallthru
          _
        // Predicated region
        $region17: #{tpu_custom_call.1} parent=11 // pred_check
          %p178 = pneg %p103
        $region18: #{tpu_custom_call.1} parent=11 // pred_check_branch
          %180 = sbr.rel (%p178) target = $region20
        $region19: #{tpu_custom_call.1} parent=11 // pred_region
          %s182 = ssub.s32 512, 512
          %183 = vsyncadd [#allocation7], %s182
          %s184 = sshll.u32 [#allocation8], 4
          %s185 = int_to_ptr.vmem [resolvable:$true] %s184
          %190 = dma.hbm_to_vmem [thread:$0]  %s2, 512, %s185, [#allocation7], 128, 128, 8
        $region20: #{tpu_custom_call.1} parent=11 // pred_fallthru
          _
        // Predicated region
        $region21: #{tpu_custom_call.1} parent=11 // pred_check
          %p191 = pneg %p124
        $region22: #{tpu_custom_call.1} parent=11 // pred_check_branch
          %193 = sbr.rel (%p191) target = $region24
        $region23: #{tpu_custom_call.1} parent=11 // pred_region
          %s195 = ssub.s32 1536, 1536
          %196 = vsyncadd [#allocation10], %s195
          %s197 = sshll.u32 [#allocation9], 4
          %s198 = int_to_ptr.vmem [resolvable:$true] %s197
          %203 = dma.hbm_to_vmem [thread:$0]  %s3, 1536, %s198, [#allocation10], 128, 128, 8
        $region24: #{tpu_custom_call.1} parent=11 // pred_fallthru
          _
      $region12: #{tpu_custom_call.1} parent=5 // pred_fallthru
        _
      %p204 = scmp.lt.s32.totalorder %s16, 4
      // Predicated region
      $region25: #{tpu_custom_call.1} parent=5 // pred_check
        %p205 = pneg %p204
      $region26: #{tpu_custom_call.1} parent=5 // pred_check_branch
        %207 = sbr.rel (%p205) target = $region28
      $region27: #{tpu_custom_call.1} parent=5 // pred_region
        // Predicated region
        $region29: #{tpu_custom_call.1} parent=27 // pred_check
          %p208 = pneg %p50
        $region30: #{tpu_custom_call.1} parent=27 // pred_check_branch
          %210 = sbr.rel (%p208) target = $region32
        $region31: #{tpu_custom_call.1} parent=27 // pred_region
          #allocation13 [shape = 'u32[6]{0}', space=smem, size = 0x18, scoped, tag = 'DMA stride descriptor']
          %s211 = sand.u32 %s40, 1
          %s212 = scalar_lea.sflag [#allocation4], %s211
          %s213 = sand.u32 %s40, 1
          %s214 = smul.addr %s213, 16
          %s215 = scalar_lea.vmem [#allocation3], %s214
          %s216 = smul.u32 2, %s23
          %s217 = smul.u32 2, %s24
          %s219 = ssub.s32 256, 256
          %220 = vsyncadd %s212, %s219
          %s221 = smul.addr %s216, 8
          %s222 = sadd.s32 %s217, %s221
          %s223 = smul.addr %s222, 64
          %s224 = scalar_lea.hbm %s0, %s223
          %s226 = sshll.u32 1, 14
          %s227 = sxor.u32 4294967295, %s226
          %s229 = sld [smem:[#allocation0]]
          %s230 = sadd.s32 2, %s229
          %s232 = sshll.u32 7, 26
          %s233 = sxor.u32 4294967295, %s232
          %s234 = sand.u32 0, %s233
          %s235 = sshll.u32 %s230, 26
          %s236 = sor.u32 %s234, %s235
          %s237 = sshll.u32 %s215, 4
          %s238 = int_to_ptr.vmem [resolvable:$true] %s237
          %244 = sst [smem:[#allocation13]] 512
          %s245 = scalar_lea.smem [#allocation13], 1
          %246 = sst [smem:[%s245]] 128
          %s247 = scalar_lea.smem [#allocation13], 2
          %248 = sst [smem:[%s247]] 2
          %s249 = scalar_lea.smem [#allocation13], 3
          %250 = sst [smem:[%s249]] 64
          %s251 = scalar_lea.smem [#allocation13], 4
          %252 = sst [smem:[%s251]] 64
          %s253 = scalar_lea.smem [#allocation13], 5
          %254 = sst [smem:[%s253]] 4
          %256 = dma.general %s224, 256, %s238, %s212, [#allocation12], [#allocation13], %s236, 0
        $region32: #{tpu_custom_call.1} parent=27 // pred_fallthru
          _
      $region28: #{tpu_custom_call.1} parent=5 // pred_fallthru
        _
      %p257 = scmp.le.s32.totalorder 1, %s16
      %p258 = scmp.lt.s32.totalorder %s16, 5
      %p259 = pnand %p257, %p258
      %p260 = pneg %p259
      // Predicated region
      $region33: #{tpu_custom_call.1} parent=5 // pred_check
        _
      $region34: #{tpu_custom_call.1} parent=5 // pred_check_branch
        %262 = sbr.rel (%p259) target = $region36
      $region35: #{tpu_custom_call.1} parent=5 // pred_region
        %s263 = ssub.s32 %s16, 1
        %s264 = sand.u32 %s43, 1
        %s265 = scalar_lea.sflag [#allocation4], %s264
        %s266 = sand.u32 %s43, 1
        %s267 = smul.addr %s266, 16
        %s268 = scalar_lea.vmem [#allocation3], %s267
        // Predicated region
        $region37: #{tpu_custom_call.1} parent=35 // pred_check
          %p269 = pneg %p56
        $region38: #{tpu_custom_call.1} parent=35 // pred_check_branch
          %271 = sbr.rel (%p269) target = $region40
        $region39: #{tpu_custom_call.1} parent=35 // pred_region
          %272 = dma.done %s265, 256
        $region40: #{tpu_custom_call.1} parent=35 // pred_fallthru
          _
        // Predicated region
        $region41: #{tpu_custom_call.1} parent=35 // pred_check
          %p273 = pneg %p82
        $region42: #{tpu_custom_call.1} parent=35 // pred_check_branch
          %275 = sbr.rel (%p273) target = $region44
        $region43: #{tpu_custom_call.1} parent=35 // pred_region
          %276 = dma.done [#allocation7], 32
        $region44: #{tpu_custom_call.1} parent=35 // pred_fallthru
          _
        // Predicated region
        $region45: #{tpu_custom_call.1} parent=35 // pred_check
          %p277 = pneg %p103
        $region46: #{tpu_custom_call.1} parent=35 // pred_check_branch
          %279 = sbr.rel (%p277) target = $region48
        $region47: #{tpu_custom_call.1} parent=35 // pred_region
          %280 = dma.done [#allocation7], 512
        $region48: #{tpu_custom_call.1} parent=35 // pred_fallthru
          _
        // Predicated region
        $region49: #{tpu_custom_call.1} parent=35 // pred_check
          %p281 = pneg %p124
        $region50: #{tpu_custom_call.1} parent=35 // pred_check_branch
          %283 = sbr.rel (%p281) target = $region52
        $region51: #{tpu_custom_call.1} parent=35 // pred_region
          %284 = dma.done [#allocation10], 1536
        $region52: #{tpu_custom_call.1} parent=35 // pred_fallthru
          _
        %s285 = sand.u32 %s43, 1
        %s286 = scalar_lea.sflag [#allocation4], %s285
        %s287 = sand.u32 %s43, 1
        %s288 = smul.addr %s287, 16
        %s289 = scalar_lea.vmem [#allocation3], %s288
        %p290 = pneg %p56
        %p291 = pneg %p53
        %p292 = pneg %p82
        %p293 = pneg %p79
        %p294 = pneg %p103
        %p295 = pneg %p100
        %p296 = pneg %p124
        %p297 = pneg %p121
        %p298 = pneg %p150
        %p299 = pneg %p147
        %s300 = smul.u32 2, %s25
        %s301 = smul.u32 2, %s26
        %p302 = scmp.eq.s32.totalorder %s26, 0
        // Predicated region
        $region53: #{tpu_custom_call.1} parent=35 // pred_check
          %p303 = pneg %p302
        $region54: #{tpu_custom_call.1} parent=35 // pred_check_branch
          %305 = sbr.rel (%p303) target = $region56
        $region55: #{tpu_custom_call.1} parent=35 // pred_region
          %vm306 = vcmask 254976
          %307 = vst.msk [vmem:[#allocation2] sm:$0x3] %vm306, 0.0
        $region56: #{tpu_custom_call.1} parent=35 // pred_fallthru
          _
        %v308 = vld [vmem:[#allocation2] sm:$0x3]
        %v309 = vld [vmem:[%s268] sm:$0xf]
        %v310 = vld [vmem:[%s268 + $0x4] sm:$0xf]
        %v311 = vld [vmem:[%s268 + $0x8] sm:$0xf]
        %v312 = vld [vmem:[%s268 + $0xc] sm:$0xf]
        %v313 = vunpack.c.l.bf16 %v309
        %v314 = vunpack.c.l.bf16 %v310
        %v315 = vunpack.c.l.bf16 %v311
        %v316 = vunpack.c.l.bf16 %v312
        %vm317 = vcmask 261120
        %v318 = vsel %vm317, %v313, 0.0
        %v319 = vsel %vm317, %v314, 0.0
        %v320 = vadd.f32 %v318, %v319
        %v321 = vrot.slane %v320, 4
        %v322 = vadd.f32 %v320, %v321
        %v323 = vrot.slane %v322, 2
        %v324 = vadd.f32 %v322, %v323
        %v325 = vrot.slane %v324, 1
        %v326 = vadd.f32 %v324, %v325
        %v327 = vsel %vm317, %v315, 0.0
        %v328 = vsel %vm317, %v316, 0.0
        %v329 = vadd.f32 %v327, %v328
        %v330 = vrot.slane %v329, 4
        %v331 = vadd.f32 %v329, %v330
        %v332 = vrot.slane %v331, 2
        %v333 = vadd.f32 %v331, %v332
        %v334 = vrot.slane %v333, 1
        %v335 = vadd.f32 %v333, %v334
        %vm338 = vcmask 1041409
        %v339 = vsel %vm338, %v335, %v326
        %v341 = vadd.f32 %v308, %v339
        %vm342 = vcmask 254976
        %343 = vst.msk [vmem:[#allocation2] sm:$0x3] %vm342, %v341
        %p344 = scmp.eq.s32.totalorder %s26, 3
        // Predicated region
        $region57: #{tpu_custom_call.1} parent=35 // pred_check
          %p345 = pneg %p344
        $region58: #{tpu_custom_call.1} parent=35 // pred_check_branch
          %347 = sbr.rel (%p345) target = $region60
        $region59: #{tpu_custom_call.1} parent=35 // pred_region
          %v348 = vld [vmem:[#allocation2] sm:$0x3]
          %v349 = vmul.f32 %v348, 0.015625
          %v350 = vld [vmem:[#allocation8] sm:$0xff]
          %v351 = vld [vmem:[#allocation8 + $0x8] sm:$0xff]
          %v352 = vld [vmem:[#allocation8 + $0x10] sm:$0xff]
          %v353 = vld [vmem:[#allocation8 + $0x18] sm:$0xff]
          %v354 = vld [vmem:[#allocation6] sm:$0x3]
          %v355 = vld [vmem:[#allocation9] sm:$0xff]
          %v356 = vld [vmem:[#allocation9 + $0x8] sm:$0xff]
          %v357 = vld [vmem:[#allocation9 + $0x10] sm:$0xff]
          %v358 = vld [vmem:[#allocation9 + $0x18] sm:$0xff]
          %v359 = vld [vmem:[#allocation9 + $0x20] sm:$0xff]
          %v360 = vld [vmem:[#allocation9 + $0x28] sm:$0xff]
          %v361 = vld [vmem:[#allocation9 + $0x30] sm:$0xff]
          %v362 = vld [vmem:[#allocation9 + $0x38] sm:$0xff]
          %v363 = vld [vmem:[#allocation9 + $0x40] sm:$0xff]
          %v364 = vld [vmem:[#allocation9 + $0x48] sm:$0xff]
          %v365 = vld [vmem:[#allocation9 + $0x50] sm:$0xff]
          %v366 = vld [vmem:[#allocation9 + $0x58] sm:$0xff]
          %vm367 = vcmask 785408
          %v369 = vsel %vm367, %v354, 0
          %371 = vmatprep.subr.mxu0 0.0
          %372 = vmatpush1.msra.mxu0 %v355
          %373 = vmatprep.subr.mxu0 0.0
          %374 = vmatpush1.msra.mxu0 %v356
          %375 = vmatprep.subr.mxu0 0.0
          %376 = vmatpush1.msra.mxu0 %v357
          %377 = vmatprep.subr.mxu0 0.0
          %378 = vmatpush1.msra.mxu0 %v358
          %379 = vmatprep.subr.mxu0 0.0
          %380 = vmatpush1.msra.mxu0 %v359
          %381 = vmatprep.subr.mxu0 0.0
          %382 = vmatpush1.msra.mxu0 %v360
          %383 = vmatprep.subr.mxu0 0.0
          %384 = vmatpush1.msra.mxu0 %v361
          %385 = vmatprep.subr.mxu0 0.0
          %386 = vmatpush1.msra.mxu0 %v362
          %387 = vmatprep.subr.mxu0 0.0
          %388 = vmatpush1.msra.mxu0 %v363
          %389 = vmatprep.subr.mxu0 0.0
          %390 = vmatpush1.msra.mxu0 %v364
          %391 = vmatprep.subr.mxu0 0.0
          %392 = vmatpush1.msra.mxu0 %v365
          %393 = vmatprep.subr.mxu0 0.0
          %394 = vmatpush1.msra.mxu0 %v366
          %395 = vmatprep.subr.mxu0 0.0
          %396 = vmatpush1.msra.mxu0 0.0
          %397 = vmatprep.subr.mxu0 0.0
          %398 = vmatpush1.msra.mxu0 0.0
          %399 = vmatprep.subr.mxu0 0.0
          %400 = vmatpush1.msra.mxu0 0.0
          %401 = vmatprep.subr.mxu0 0.0
          %402 = vmatpush1.msra.mxu0 0.0
          %403 = vmatprep.subr.mxu0 0.0
          %404 = vmatpush1.msra.mxu0 0.0
          %405 = vmatprep.subr.mxu0 0.0
          %406 = vmatpush1.msra.mxu0 0.0
          %407 = vmatprep.subr.mxu0 0.0
          %408 = vmatpush1.msra.mxu0 0.0
          %409 = vmatprep.subr.mxu0 0.0
          %410 = vmatpush1.msra.mxu0 0.0
          %411 = vmatprep.subr.mxu0 0.0
          %412 = vmatpush1.msra.mxu0 0.0
          %413 = vmatprep.subr.mxu0 0.0
          %414 = vmatpush1.msra.mxu0 0.0
          %415 = vmatprep.subr.mxu0 0.0
          %416 = vmatpush1.msra.mxu0 0.0
          %417 = vmatprep.subr.mxu0 0.0
          %418 = vmatpush1.msra.mxu0 0.0
          %419 = vmatprep.subr.mxu0 0.0
          %420 = vmatpush1.msra.mxu0 0.0
          %421 = vmatprep.subr.mxu0 0.0
          %422 = vmatpush1.msra.mxu0 0.0
          %423 = vmatprep.subr.mxu0 0.0
          %424 = vmatpush1.msra.mxu0 0.0
          %425 = vmatprep.subr.mxu0 0.0
          %426 = vmatpush1.msra.mxu0 0.0
          %427 = vmatprep.subr.mxu0 0.0
          %428 = vmatpush1.msra.mxu0 0.0
          %429 = vmatprep.subr.mxu0 0.0
          %430 = vmatpush1.msra.mxu0 0.0
          %431 = vmatprep.subr.mxu0 0.0
          %432 = vmatpush1.msra.mxu0 0.0
          %433 = vmatprep.subr.mxu0 0.0
          %434 = vmatpush1.msra.mxu0 0.0
          %435 = vmatprep.mubr.f32.mxu0 0.0
          %436 = vmatmul.mubr.f32.gmra.mrb[0].mxu0 %v369
          %v437 = vpop.f32.mrb[0].mxu0
          %v438 = vadd.f32 0.0, %v437
          %v439 = vpop.f32.mrb[0].mxu0
          %440 = vdwg.mxu0
          %v442 = vsel %vm317, %v349, 0
          %444 = vmatprep.subr.mxu0 0.0
          %445 = vmatpush1.msra.mxu0 %v350
          %446 = vmatprep.subr.mxu0 0.0
          %447 = vmatpush1.msra.mxu0 %v351
          %448 = vmatprep.subr.mxu0 0.0
          %449 = vmatpush1.msra.mxu0 %v352
          %450 = vmatprep.subr.mxu0 0.0
          %451 = vmatpush1.msra.mxu0 %v353
          %452 = vmatprep.subr.mxu0 0.0
          %453 = vmatpush1.msra.mxu0 0.0
          %454 = vmatprep.subr.mxu0 0.0
          %455 = vmatpush1.msra.mxu0 0.0
          %456 = vmatprep.subr.mxu0 0.0
          %457 = vmatpush1.msra.mxu0 0.0
          %458 = vmatprep.subr.mxu0 0.0
          %459 = vmatpush1.msra.mxu0 0.0
          %460 = vmatprep.subr.mxu0 0.0
          %461 = vmatpush1.msra.mxu0 0.0
          %462 = vmatprep.subr.mxu0 0.0
          %463 = vmatpush1.msra.mxu0 0.0
          %464 = vmatprep.subr.mxu0 0.0
          %465 = vmatpush1.msra.mxu0 0.0
          %466 = vmatprep.subr.mxu0 0.0
          %467 = vmatpush1.msra.mxu0 0.0
          %468 = vmatprep.subr.mxu0 0.0
          %469 = vmatpush1.msra.mxu0 0.0
          %470 = vmatprep.subr.mxu0 0.0
          %471 = vmatpush1.msra.mxu0 0.0
          %472 = vmatprep.subr.mxu0 0.0
          %473 = vmatpush1.msra.mxu0 0.0
          %474 = vmatprep.subr.mxu0 0.0
          %475 = vmatpush1.msra.mxu0 0.0
          %476 = vmatprep.subr.mxu0 0.0
          %477 = vmatpush1.msra.mxu0 0.0
          %478 = vmatprep.subr.mxu0 0.0
          %479 = vmatpush1.msra.mxu0 0.0
          %480 = vmatprep.subr.mxu0 0.0
          %481 = vmatpush1.msra.mxu0 0.0
          %482 = vmatprep.subr.mxu0 0.0
          %483 = vmatpush1.msra.mxu0 0.0
          %484 = vmatprep.subr.mxu0 0.0
          %485 = vmatpush1.msra.mxu0 0.0
          %486 = vmatprep.subr.mxu0 0.0
          %487 = vmatpush1.msra.mxu0 0.0
          %488 = vmatprep.subr.mxu0 0.0
          %489 = vmatpush1.msra.mxu0 0.0
          %490 = vmatprep.subr.mxu0 0.0
          %491 = vmatpush1.msra.mxu0 0.0
          %492 = vmatprep.subr.mxu0 0.0
          %493 = vmatpush1.msra.mxu0 0.0
          %494 = vmatprep.subr.mxu0 0.0
          %495 = vmatpush1.msra.mxu0 0.0
          %496 = vmatprep.subr.mxu0 0.0
          %497 = vmatpush1.msra.mxu0 0.0
          %498 = vmatprep.subr.mxu0 0.0
          %499 = vmatpush1.msra.mxu0 0.0
          %500 = vmatprep.subr.mxu0 0.0
          %501 = vmatpush1.msra.mxu0 0.0
          %502 = vmatprep.subr.mxu0 0.0
          %503 = vmatpush1.msra.mxu0 0.0
          %504 = vmatprep.subr.mxu0 0.0
          %505 = vmatpush1.msra.mxu0 0.0
          %506 = vmatprep.subr.mxu0 0.0
          %507 = vmatpush1.msra.mxu0 0.0
          %508 = vmatprep.mubr.f32.mxu0 0.0
          %509 = vmatmul.mubr.f32.gmra.mrb[0].mxu0 %v442
          %v510 = vpop.f32.mrb[0].mxu0
          %v511 = vadd.f32 %v438, %v510
          %v512 = vpop.f32.mrb[0].mxu0
          %513 = vdwg.mxu0
          %v514 = vxor.u32 %v511, 2147483648
          %v515 = vmul.f32 %v514, 1.442695
          %v516 = vpow.pop %v515
          %v517 = vadd.f32 %v516, 1.0
          %v518 = vrcp.pop %v517
          %v519 = vmul.f32 1.0, %v518
          %520 = vst [vmem:[#allocation11] sm:$0x3] %v519
        $region60: #{tpu_custom_call.1} parent=35 // pred_fallthru
          _
        // Predicated region
        $region61: #{tpu_custom_call.1} parent=35 // pred_check
          %p521 = pneg %p147
        $region62: #{tpu_custom_call.1} parent=35 // pred_check_branch
          %523 = sbr.rel (%p521) target = $region64
        $region63: #{tpu_custom_call.1} parent=35 // pred_region
          %s525 = ssub.s32 32, 32
          %526 = vsyncadd [#allocation5], %s525
          %s527 = smul.addr %s25, 32
          %s528 = scalar_lea.hbm %s4, %s527
          %s530 = sshll.u32 [#allocation11], 4
          %s531 = int_to_ptr.vmem [resolvable:$true] %s530
          %533 = dma.vmem_to_hbm [thread:$0]  %s531, 32, %s528, [#allocation5]
        $region64: #{tpu_custom_call.1} parent=35 // pred_fallthru
          _
        // Predicated region
        $region65: #{tpu_custom_call.1} parent=35 // pred_check
          %p534 = pneg %p147
        $region66: #{tpu_custom_call.1} parent=35 // pred_check_branch
          %536 = sbr.rel (%p534) target = $region68
        $region67: #{tpu_custom_call.1} parent=35 // pred_region
          %537 = dma.done [#allocation5], 32
        $region68: #{tpu_custom_call.1} parent=35 // pred_fallthru
          _
      $region36: #{tpu_custom_call.1} parent=5 // pred_fallthru
        _
      %p538 = scmp.le.s32.totalorder 2, %s16
      // Predicated region
      $region69: #{tpu_custom_call.1} parent=5 // pred_check
        %p539 = pneg %p538
      $region70: #{tpu_custom_call.1} parent=5 // pred_check_branch
        %541 = sbr.rel (%p539) target = $region72
      $region71: #{tpu_custom_call.1} parent=5 // pred_region
        %s542 = ssub.s32 %s16, 2
      $region72: #{tpu_custom_call.1} parent=5 // pred_fallthru
        _
    $region6: #{tpu_custom_call.1} parent=1 // loop_footer
      %s20 = sadd.s32 1, %s16
    $region7: #{tpu_custom_call.1} parent=1 // loop_footer_branch
      %15 = sbr.rel target = $region3
    $region8: #{tpu_custom_call.1} parent=1 // loop_exit
      _
    %543 = vsyncpa [#allocation4], 1
    %s544 = scalar_lea.sflag [#allocation4], 1
    %545 = vsyncpa %s544, 1
    %546 = vsyncpa [#allocation7], 1
    %547 = vsyncpa [#allocation10], 1
    %548 = vsyncpa [#allocation5], 1
    %s549 = scalar_lea.sflag [#allocation5], 1
    %550 = vsyncpa %s549, 1

</llo_original>
